<compile_context>
chip_gen: v5e
topology: v5e:2x2
jax: 0.10.0
libtpu: 0.0.40
codegen_flags: <defaults>
</compile_context>

<pallas_src>
import jax
import jax.numpy as jnp
from jax import lax
from jax.experimental import pallas as pl
from jax.experimental.pallas import tpu as pltpu

_MIN_GRID_STEPS = 8                      # pipelining + v7x 2-TC split when B allows
_PER_BLOCK_CAP_BYTES = 2 * 1024 * 1024   # ~2 MiB per input block (roofline-sized)


def _vmem_budgets():
    """Generation-aware scoped-VMEM limit and tile working-set budget."""
    phys = 64 * 1024 * 1024                         # conservative default (v7x per-TC)
    try:
        info = pltpu.get_tpu_info()
        phys = int(getattr(info, "vmem_capacity_bytes", phys)) or phys
    except Exception:
        pass
    vmem_limit = min(phys // 2, 64 * 1024 * 1024)   # 32 MiB on v7x, 64 MiB on v5e/v6e
    tile_budget = vmem_limit // 2                   # headroom for scratch / pipeline slack
    return vmem_limit, tile_budget


def _norm_kernel(scale_ref, x_ref, o_ref):
    # scale_ref : SMEM (1,)   -- the learnable norm_s scalar
    # x_ref     : VMEM (tb, D)
    # o_ref     : VMEM (tb, D)
    x = x_ref[...].astype(jnp.float32)
    # L2 norm along the last axis (torch dim=1), keepdim -> (tb, 1)
    sq_sum = jnp.sum(x * x, axis=-1, keepdims=True)
    # Per-row coefficient: scale / ||x||. rsqrt on the (tb,1) column keeps the
    # transcendental work O(tb); the only full-width VPU op left is one multiply.
    # NOTE: no epsilon, matching torch.norm (a zero row gives inf/nan in torch too).
    coef = scale_ref[0] * lax.rsqrt(sq_sum)
    o_ref[...] = (x * coef).astype(o_ref.dtype)


def _pick_tile_b(B, D, dtype, tile_budget_bytes):
    """Batch tile that (a) keeps blocks small enough for DMA/compute overlap,
    (b) guarantees >= _MIN_GRID_STEPS grid steps when B allows, (c) respects
    sublane packing, and (d) fits the double-buffered working set (including
    the f32 upcast intermediates) in the VMEM budget."""
    itemsize = jnp.dtype(dtype).itemsize
    pack = 8 * max(1, 4 // itemsize)            # 8 rows f32, 16 bf16, 32 int8/fp8
    if B <= pack:
        return B                                # full batch dim (always legal)
    # Per tile row held in VMEM: 2x dbl-buffered input + 2x dbl-buffered output
    # blocks (native dtype) plus ~2 f32 rows of body intermediates (the upcast
    # x and the x*coef product).
    bytes_per_row = 4 * D * itemsize + 2 * D * 4
    rows_block_cap = _PER_BLOCK_CAP_BYTES // max(1, D * itemsize)
    rows_vmem_cap = tile_budget_bytes // max(1, bytes_per_row)
    rows_min_steps = pl.cdiv(B, _MIN_GRID_STEPS)
    tile_b = max(pack, min(rows_block_cap, rows_vmem_cap, rows_min_steps))
    tile_b = (tile_b // pack) * pack            # sublane aligned (>= 8)
    if tile_b >= B:
        return B
    # TODO(synk): for very large D (where even `pack` rows x D exceeds the
    # VMEM budget) add a second "arbitrary" grid axis over D with a per-row
    # partial-sum scratch instead of clamping the tile to `pack` rows.
    return tile_b


def normalization_layer(x, norm_s, *, tile_b=None):
    """x: (B, D) array. norm_s: scalar (learnable) scale. Returns (B, D)."""
    B, D = x.shape
    vmem_limit, tile_budget = _vmem_budgets()
    if tile_b is None:
        tile_b = _pick_tile_b(B, D, x.dtype, tile_budget)
    scale = jnp.asarray(norm_s, dtype=jnp.float32).reshape((1,))

    grid = (pl.cdiv(B, tile_b),)                # padded last block; stores masked
    return pl.pallas_call(
        _norm_kernel,
        out_shape=jax.ShapeDtypeStruct((B, D), x.dtype),
        grid_spec=pltpu.PrefetchScalarGridSpec(
            num_scalar_prefetch=0,
            grid=grid,
            in_specs=[
                pl.BlockSpec(memory_space=pltpu.MemorySpace.SMEM),      # scale
                pl.BlockSpec((tile_b, D), lambda i: (i, 0)),            # x tile
            ],
            out_specs=pl.BlockSpec((tile_b, D), lambda i: (i, 0)),
        ),
        compiler_params=pltpu.CompilerParams(
            dimension_semantics=("parallel",),
            vmem_limit_bytes=vmem_limit,
        ),
    )(scale, x)


def _reference(x, norm_s):
    xf = x.astype(jnp.float32)
    nrm = jnp.sqrt(jnp.sum(xf * xf, axis=1, keepdims=True))
    return (jnp.float32(norm_s) * xf / nrm).astype(x.dtype)


if __name__ == "__main__":
    key = jax.random.PRNGKey(0)

    # --- small shape: auto tile picker now yields grid=(2,) (not a single block) ---
    B, D = 16, 128
    x = jax.random.normal(key, (B, D), dtype=jnp.float32)
    # Deterministic parameter init matching NormalizationLayer(normalize_scale=1.0,
    # learn_scale=True): a single learnable scalar initialized to 1.0.
    norm_s = jnp.float32(1.0)
    out = jax.block_until_ready(normalization_layer(x, norm_s))
    ref = _reference(x, norm_s)
    assert out.shape == x.shape and out.dtype == x.dtype
    assert jnp.max(jnp.abs(out - ref)) < 1e-5

    # --- multi-block path (explicit tile override) ---
    k1 = jax.random.PRNGKey(1)
    x2 = jax.random.normal(k1, (256, 256), dtype=jnp.float32)
    out2 = jax.block_until_ready(normalization_layer(x2, jnp.float32(4.0), tile_b=64))
    ref2 = _reference(x2, jnp.float32(4.0))
    assert jnp.max(jnp.abs(out2 - ref2)) < 1e-4

    # --- batch not divisible by the tile: cdiv grid + masked last block ---
    k2 = jax.random.PRNGKey(2)
    x3 = jax.random.normal(k2, (100, 128), dtype=jnp.float32)
    out3 = jax.block_until_ready(normalization_layer(x3, jnp.float32(2.0)))
    ref3 = _reference(x3, jnp.float32(2.0))
    assert jnp.max(jnp.abs(out3 - ref3)) < 1e-4

    # --- bf16 input (f32 accumulation inside the kernel) ---
    k3 = jax.random.PRNGKey(3)
    x4 = jax.random.normal(k3, (64, 256), dtype=jnp.bfloat16)
    out4 = jax.block_until_ready(normalization_layer(x4, jnp.float32(1.0)))
    ref4 = _reference(x4, jnp.float32(1.0))
    assert out4.dtype == jnp.bfloat16
    assert jnp.max(jnp.abs(out4.astype(jnp.float32) - ref4.astype(jnp.float32))) < 2e-2

    print("KERNEL_OK")
</pallas_src>

<mosaic_0001>
module attributes {stable_mosaic.version = 11 : i64} {
  func.func @_norm_kernel(%arg0: i32, %arg1: memref<1xf32, #tpu.memory_space<smem>>, %arg2: memref<8x128xf32, #tpu.memory_space<vmem>>, %arg3: memref<8x128xf32, #tpu.memory_space<vmem>>) attributes {dimension_semantics = [#tpu.dimension_semantics<parallel>], iteration_bounds = array<i64: 2>, scalar_prefetch = 0 : i64, scratch_operands = 0 : i64, tpu.core_type = #tpu.core_type<tc>, window_params = [{transform_indices = @transform_0, window_bounds = array<i64: 1>}, {transform_indices = @transform_1, window_bounds = array<i64: 8, 128>}, {transform_indices = @transform_2, window_bounds = array<i64: 8, 128>}]} {
    %c0 = arith.constant 0 : index
    %c0_0 = arith.constant 0 : index
    %0 = vector.load %arg2[%c0, %c0_0] : memref<8x128xf32, #tpu.memory_space<vmem>>, vector<8x128xf32>
    %1 = arith.mulf %0, %0 : vector<8x128xf32>
    %cst = arith.constant dense<0.000000e+00> : vector<8xf32>
    %2 = vector.multi_reduction <add>, %1, %cst [1] : vector<8x128xf32> to vector<8xf32>
    %3 = vector.shape_cast %2 : vector<8xf32> to vector<8x1xf32>
    %c0_1 = arith.constant 0 : index
    %4 = memref.load %arg1[%c0_1] : memref<1xf32, #tpu.memory_space<smem>>
    %5 = math.rsqrt %3 : vector<8x1xf32>
    %6 = vector.broadcast %4 : f32 to vector<8x1xf32>
    %7 = arith.mulf %6, %5 : vector<8x1xf32>
    %8 = vector.broadcast %7 : vector<8x1xf32> to vector<8x128xf32>
    %9 = arith.mulf %0, %8 : vector<8x128xf32>
    %c0_2 = arith.constant 0 : index
    %c0_3 = arith.constant 0 : index
    %10 = vector.load %arg3[%c0_2, %c0_3] : memref<8x128xf32, #tpu.memory_space<vmem>>, vector<8x128xf32>
    tpu.vector_store %arg3[%c0_2, %c0_3], %9 {strides = array<i32>} : memref<8x128xf32, #tpu.memory_space<vmem>>, vector<8x128xf32>,
    return
  }
  func.func @transform_0(%arg0: i32) -> i32 {
    %c0_i32 = arith.constant 0 : i32
    %c0_i32_0 = arith.constant 0 : i32
    return %c0_i32 : i32
  }
  func.func @transform_1(%arg0: i32) -> (i32, i32) {
    %c0_i32 = arith.constant 0 : i32
    %c0_i32_0 = arith.constant 0 : i32
    return %arg0, %c0_i32 : i32, i32
  }
  func.func @transform_2(%arg0: i32) -> (i32, i32) {
    %c0_i32 = arith.constant 0 : i32
    %c0_i32_0 = arith.constant 0 : i32
    return %arg0, %c0_i32 : i32, i32
  }
}

</mosaic_0001>

<llo_original>
// kernel: tpu_custom_call.1
$region0: #{tpu_custom_call.1}
  #allocation0 [shape = 'u32[]', space=smem, size = 0x4, offset = 0x4, fixed_abs, tag = 'smem constant byte address 0x4 - core index']
  #allocation1 [shape = 'u32[72,128]{1,0:T(1,128)}', space=vmem, size = 0x9000, scoped, tag = 'internal scratch']
  #allocation2 [shape = 'f32[1]{0:T(128)S(6)}', space=smem, size = 0x200, scoped, tag = 'scoped memory for tpu_custom_call.1']
  %s0 = inlined_call_operand.<no memory space> [shape: f32[1], index: 0, kind: input, shape index: {}]
  %s1 = inlined_call_operand.hbm [shape: f32[16,128], index: 1, kind: input, shape index: {}]
  %s2 = inlined_call_operand.hbm [shape: f32[16,128], index: 2, kind: output, shape index: {}]
  %s3 = sld [smem:[#allocation0]]
  $region45: #{tpu_custom_call.1} parent=0
    _
  %s5 = ssub.s32 1, %s3
  %s6 = scalar_select 0, %s5, %s3
  %7 = sst [smem:[#allocation2]] %s0
  $region1: #{tpu_custom_call.1} parent=0
    #allocation3 [shape = 'u8[8192]{0}', space=vmem, size = 0x2000, scoped, tag = 'input window, operand 1']
    #allocation4 [shape = 's32[2]{0}', space=sflag, size = 0x8, scoped, tag = 'scoped memory for tpu_custom_call.1']
    #allocation5 [shape = 's32[2]{0}', space=sflag, size = 0x8, scoped, tag = 'scoped memory for tpu_custom_call.1']
    #allocation6 [shape = 'u8[8192]{0}', space=vmem, size = 0x2000, scoped, tag = 'output window, operand 0']
    %8 = vsyncpa [#allocation4], 0
    %s9 = scalar_lea.sflag [#allocation4], 1
    %10 = vsyncpa %s9, 0
    %11 = vsyncpa [#allocation5], 0
    %s12 = scalar_lea.sflag [#allocation5], 1
    %13 = vsyncpa %s12, 0
    loop: start=0, step=1, limit=4
    $region2: #{tpu_custom_call.1} parent=1 // loop_pre_header
      _
    $region3: #{tpu_custom_call.1} parent=1 // loop_header
      %s15 = sphi 0, %s19
      %p16 = scmp.ge.s32.totalorder %s15, 4
      %s23 = sphi 0, %s23
      %s25 = sphi 0, %s23
      %s26 = sphi 0, %s25
      %s40 = sphi 0, %s26
      %s46 = sphi 0, %s48
      %s49 = sphi 0, %s46
      %s50 = sphi 0, %s49
      %s66 = sphi 0, %s50
      %s72 = sphi 0, %s74
      %s75 = sphi 0, %s72
      %s76 = sphi 0, %s75
      %s92 = sphi 0, %s76
    $region4: #{tpu_custom_call.1} parent=1 // loop_header_branch
      %18 = sbr.rel (%p16) target = $region8
    $region5: #{tpu_custom_call.1} parent=1 // loop_body
      %s20 = ssub.s32 %s15, 1
      %s21 = ssub.s32 %s15, 2
      %s22 = sadd.s32 %s15, 1
      %s24 = sadd.s32 %s23, 1
      %p27 = scmp.eq.s32.totalorder %s15, 1
      %p28 = scmp.ne.s32.totalorder %s23, %s25
      %p29 = scmp.eq.s32.totalorder %s15, 0
      %p30 = por %p28, %p29
      %p31 = scmp.ne.s32.totalorder %s23, %s25
      %p32 = scmp.eq.s32.totalorder %s20, 1
      %p33 = por %p31, %p32
      %p34 = scmp.ne.s32.totalorder %s25, %s26
      %p35 = scmp.eq.s32.totalorder %s20, 0
      %p36 = por %p34, %p35
      %p37 = scmp.ne.s32.totalorder %s25, %s26
      %p38 = scmp.eq.s32.totalorder %s21, 1
      %p39 = por %p37, %p38
      %p41 = scmp.ne.s32.totalorder %s26, %s40
      %p42 = scmp.eq.s32.totalorder %s21, 0
      %p43 = por %p41, %p42
      %s44 = ssub.s32 %s15, %s22
      %p45 = scmp.eq.s32.totalorder %s44, 0
      %s47 = sadd.s32 %s46, 1
      %s48 = scalar_select %p45, %s46, %s47
      %p51 = pneg %p45
      %p52 = scmp.eq.s32.totalorder %s15, 1
      %p53 = por %p51, %p52
      %p54 = scmp.ne.s32.totalorder %s46, %s49
      %p55 = scmp.eq.s32.totalorder %s15, 0
      %p56 = por %p54, %p55
      %p57 = scmp.ne.s32.totalorder %s46, %s49
      %p58 = scmp.eq.s32.totalorder %s20, 1
      %p59 = por %p57, %p58
      %p60 = scmp.ne.s32.totalorder %s49, %s50
      %p61 = scmp.eq.s32.totalorder %s20, 0
      %p62 = por %p60, %p61
      %p63 = scmp.ne.s32.totalorder %s49, %s50
      %p64 = scmp.eq.s32.totalorder %s21, 1
      %p65 = por %p63, %p64
      %p67 = scmp.ne.s32.totalorder %s50, %s66
      %p68 = scmp.eq.s32.totalorder %s21, 0
      %p69 = por %p67, %p68
      %s70 = ssub.s32 %s15, %s22
      %p71 = scmp.eq.s32.totalorder %s70, 0
      %s73 = sadd.s32 %s72, 1
      %s74 = scalar_select %p71, %s72, %s73
      %p77 = pneg %p71
      %p78 = scmp.eq.s32.totalorder %s15, 1
      %p79 = por %p77, %p78
      %p80 = scmp.ne.s32.totalorder %s72, %s75
      %p81 = scmp.eq.s32.totalorder %s15, 0
      %p82 = por %p80, %p81
      %p83 = scmp.ne.s32.totalorder %s72, %s75
      %p84 = scmp.eq.s32.totalorder %s20, 1
      %p85 = por %p83, %p84
      %p86 = scmp.ne.s32.totalorder %s75, %s76
      %p87 = scmp.eq.s32.totalorder %s20, 0
      %p88 = por %p86, %p87
      %p89 = scmp.ne.s32.totalorder %s75, %s76
      %p90 = scmp.eq.s32.totalorder %s21, 1
      %p91 = por %p89, %p90
      %p93 = scmp.ne.s32.totalorder %s76, %s92
      %p94 = scmp.eq.s32.totalorder %s21, 0
      %p95 = por %p93, %p94
      %p96 = scmp.le.s32.totalorder 1, %s15
      %p97 = scmp.lt.s32.totalorder %s15, 3
      %p98 = pnand %p96, %p97
      %p99 = pneg %p98
      // Predicated region
      $region9: #{tpu_custom_call.1} parent=5 // pred_check
        _
      $region10: #{tpu_custom_call.1} parent=5 // pred_check_branch
        %101 = sbr.rel (%p98) target = $region12
      $region11: #{tpu_custom_call.1} parent=5 // pred_region
        %s102 = ssub.s32 %s15, 1
        // Predicated region
        $region13: #{tpu_custom_call.1} parent=11 // pred_check
          %p103 = pneg %p36
        $region14: #{tpu_custom_call.1} parent=11 // pred_check_branch
          %105 = sbr.rel (%p103) target = $region16
        $region15: #{tpu_custom_call.1} parent=11 // pred_region
          _
        $region16: #{tpu_custom_call.1} parent=11 // pred_fallthru
          _
      $region12: #{tpu_custom_call.1} parent=5 // pred_fallthru
        _
      %p106 = scmp.lt.s32.totalorder %s15, 2
      // Predicated region
      $region17: #{tpu_custom_call.1} parent=5 // pred_check
        %p107 = pneg %p106
      $region18: #{tpu_custom_call.1} parent=5 // pred_check_branch
        %109 = sbr.rel (%p107) target = $region20
      $region19: #{tpu_custom_call.1} parent=5 // pred_region
        // Predicated region
        $region21: #{tpu_custom_call.1} parent=19 // pred_check
          %p110 = pneg %p56
        $region22: #{tpu_custom_call.1} parent=19 // pred_check_branch
          %112 = sbr.rel (%p110) target = $region24
        $region23: #{tpu_custom_call.1} parent=19 // pred_region
          %s113 = sand.u32 %s46, 1
          %s114 = scalar_lea.sflag [#allocation4], %s113
          %s115 = sand.u32 %s46, 1
          %s116 = smul.addr %s115, 8
          %s117 = scalar_lea.vmem [#allocation3], %s116
          %119 = vsyncadd %s114, 0
          %s120 = smul.addr %s15, 8
          %s121 = scalar_lea.hbm %s1, %s120
          %s123 = sshll.u32 %s121, 4
          %s124 = int_to_ptr.hbm [resolvable:$true] %s123
          %s125 = sshll.u32 %s117, 4
          %s126 = int_to_ptr.vmem [resolvable:$true] %s125
          %128 = dma.hbm_to_vmem [thread:$0]  %s124, 128, %s126, %s114
        $region24: #{tpu_custom_call.1} parent=19 // pred_fallthru
          _
      $region20: #{tpu_custom_call.1} parent=5 // pred_fallthru
        _
      %p129 = scmp.le.s32.totalorder 1, %s15
      %p130 = scmp.lt.s32.totalorder %s15, 3
      %p131 = pnand %p129, %p130
      %p132 = pneg %p131
      // Predicated region
      $region25: #{tpu_custom_call.1} parent=5 // pred_check
        _
      $region26: #{tpu_custom_call.1} parent=5 // pred_check_branch
        %134 = sbr.rel (%p131) target = $region28
      $region27: #{tpu_custom_call.1} parent=5 // pred_region
        %s135 = ssub.s32 %s15, 1
        %s136 = sand.u32 %s49, 1
        %s137 = scalar_lea.sflag [#allocation4], %s136
        %s138 = sand.u32 %s49, 1
        %s139 = smul.addr %s138, 8
        %s140 = scalar_lea.vmem [#allocation3], %s139
        // Predicated region
        $region29: #{tpu_custom_call.1} parent=27 // pred_check
          %p141 = pneg %p62
        $region30: #{tpu_custom_call.1} parent=27 // pred_check_branch
          %143 = sbr.rel (%p141) target = $region32
        $region31: #{tpu_custom_call.1} parent=27 // pred_region
          %145 = dma.done %s137, 128
        $region32: #{tpu_custom_call.1} parent=27 // pred_fallthru
          _
        %p146 = pneg %p36
        %p147 = pneg %p33
        %s148 = sand.u32 %s49, 1
        %s149 = scalar_lea.sflag [#allocation4], %s148
        %s150 = sand.u32 %s49, 1
        %s151 = smul.addr %s150, 8
        %s152 = scalar_lea.vmem [#allocation3], %s151
        %p153 = pneg %p62
        %p154 = pneg %p59
        %p155 = pneg %p88
        %p156 = pneg %p85
        %s157 = sand.u32 %s75, 1
        %s158 = scalar_lea.sflag [#allocation5], %s157
        %s159 = sand.u32 %s75, 1
        %s160 = smul.addr %s159, 8
        %s161 = scalar_lea.vmem [#allocation6], %s160
        %v162 = vld [vmem:[%s140] sm:$0xff]
        %v163 = vmul.f32 %v162, %v162
        %164 = vadd.xlane.f32.xlu0 %v163
        %v165 = vpop.xlane.xlu0 %164
        %s166 = sld [smem:[#allocation2]]
        %v167 = vrsqrt.pop %v165
        %v168 = vmul.f32 %v167, %v165
        %v169 = vmul.f32 %v168, %v167
        %v170 = vmul.f32 0.5, %v169
        %v171 = vsub.f32 1.5, %v170
        %v172 = vmul.f32 %v167, %v171
        %vm173 = vweird.f32 %v165
        %vm174 = vweird.f32 %v167
        %vm175 = vmor %vm173, %vm174
        %v176 = vsel %vm175, %v167, %v172
        %v177 = vstv %s166
        %v178 = vmul.f32 %v177, %v176
        %v179 = vmul.f32 %v162, %v178
        %180 = vst [vmem:[%s161] sm:$0xff] %v179
        %s181 = sand.u32 %s75, 1
        %s182 = scalar_lea.sflag [#allocation5], %s181
        %s183 = sand.u32 %s75, 1
        %s184 = smul.addr %s183, 8
        %s185 = scalar_lea.vmem [#allocation6], %s184
        // Predicated region
        $region33: #{tpu_custom_call.1} parent=27 // pred_check
          %p186 = pneg %p85
        $region34: #{tpu_custom_call.1} parent=27 // pred_check_branch
          %188 = sbr.rel (%p186) target = $region36
        $region35: #{tpu_custom_call.1} parent=27 // pred_region
          %190 = vsyncadd %s182, 0
          %s191 = smul.addr %s20, 8
          %s192 = scalar_lea.hbm %s2, %s191
          %s194 = sshll.u32 %s185, 4
          %s195 = int_to_ptr.vmem [resolvable:$true] %s194
          %s196 = sshll.u32 %s192, 4
          %s197 = int_to_ptr.hbm [resolvable:$true] %s196
          %199 = dma.vmem_to_hbm [thread:$0]  %s195, 128, %s197, %s182
        $region36: #{tpu_custom_call.1} parent=27 // pred_fallthru
          _
      $region28: #{tpu_custom_call.1} parent=5 // pred_fallthru
        _
      %p200 = scmp.le.s32.totalorder 2, %s15
      // Predicated region
      $region37: #{tpu_custom_call.1} parent=5 // pred_check
        %p201 = pneg %p200
      $region38: #{tpu_custom_call.1} parent=5 // pred_check_branch
        %203 = sbr.rel (%p201) target = $region40
      $region39: #{tpu_custom_call.1} parent=5 // pred_region
        %s204 = ssub.s32 %s15, 2
        // Predicated region
        $region41: #{tpu_custom_call.1} parent=39 // pred_check
          %p205 = pneg %p91
        $region42: #{tpu_custom_call.1} parent=39 // pred_check_branch
          %207 = sbr.rel (%p205) target = $region44
        $region43: #{tpu_custom_call.1} parent=39 // pred_region
          %s208 = sand.u32 %s76, 1
          %s209 = scalar_lea.sflag [#allocation5], %s208
          %s210 = sand.u32 %s76, 1
          %s211 = smul.addr %s210, 8
          %s212 = scalar_lea.vmem [#allocation6], %s211
          %214 = dma.done %s209, 128
        $region44: #{tpu_custom_call.1} parent=39 // pred_fallthru
          _
      $region40: #{tpu_custom_call.1} parent=5 // pred_fallthru
        _
    $region6: #{tpu_custom_call.1} parent=1 // loop_footer
      %s19 = sadd.s32 1, %s15
    $region7: #{tpu_custom_call.1} parent=1 // loop_footer_branch
      %14 = sbr.rel target = $region3
    $region8: #{tpu_custom_call.1} parent=1 // loop_exit
      _
    %215 = vsyncpa [#allocation4], 1
    %s216 = scalar_lea.sflag [#allocation4], 1
    %217 = vsyncpa %s216, 1
    %218 = vsyncpa [#allocation5], 1
    %s219 = scalar_lea.sflag [#allocation5], 1
    %220 = vsyncpa %s219, 1

</llo_original>
